<compile_context>
chip_gen: v5e
topology: v5e:2x2
jax: 0.10.0
libtpu: 0.0.40
codegen_flags: <defaults>
</compile_context>

<pallas_src>
import functools

import jax
import jax.numpy as jnp
from jax.experimental import pallas as pl
from jax.experimental.pallas import tpu as pltpu


def _round_up(n, m):
    return ((n + m - 1) // m) * m


def _cdiv(a, b):
    return -(-a // b)


def _is_multi_tensorcore():
    """Best-effort: does this chip expose >1 TensorCore (v7x) / a megacore (v4, v5p)?"""
    try:
        kind = jax.devices()[0].device_kind.lower()
    except Exception:  # pragma: no cover - defensive; fall back to single-TC behavior
        return False
    return any(tag in kind for tag in ("v7", "v4", "v5p"))


def _choose_tiling(batch, *, max_tile=2048, prefer_even_grid=False):
    """Pick (block_batch, grid) independent of batch factorization.

    The tile is chosen first (large, to amortize the ~600-cycle per-grid-step overhead) and the
    batch is padded up to grid * block_batch by the caller.  On multi-TC chips we force an even
    grid count so both cores get balanced work.
    """
    b8 = _round_up(max(batch, 1), 8)
    grid = _cdiv(b8, max_tile)
    if prefer_even_grid and grid % 2 == 1 and b8 > 8:
        grid += 1
    block_batch = _round_up(_cdiv(b8, grid), 8)
    return block_batch, grid


def _prep_params(params, n_enc, n_dec, use_bf16):
    """Pre-cast matmul weights to bf16 once (biases / attribute rows stay f32)."""
    params = list(params)
    if not use_bf16:
        return params
    out = []
    idx = 0
    for _ in range(n_enc):
        out += [params[idx].astype(jnp.bfloat16), params[idx + 1]]
        idx += 2
    for _ in range(n_dec):
        out += [params[idx].astype(jnp.bfloat16), params[idx + 1], params[idx + 2]]
        idx += 3
    out += [params[idx].astype(jnp.bfloat16), params[idx + 1]]
    return out


def _generator_kernel(n_enc, n_dec, use_bf16, x_ref, a_ref, *refs):
    """Fused MLP forward over one (block_batch, ...) batch tile.

    refs = ([W_enc_i, b_enc_i] * n_enc,
            [Wz_dec_i, wa_dec_i, b_dec_i] * n_dec,   # wa is the attribute row of the cat-Linear
            W_out, b_out,
            o_ref)
    """
    o_ref = refs[-1]
    params = refs[:-1]
    op_dt = jnp.bfloat16 if use_bf16 else jnp.float32

    def dot(lhs, w_ref):
        return jnp.dot(lhs.astype(op_dt), w_ref[...], preferred_element_type=jnp.float32)

    a = a_ref[...]                         # (tb, 1), f32 throughout
    z = x_ref[...]
    idx = 0

    # ---- encoder: Linear + ReLU per layer ----
    for _ in range(n_enc):
        w, b = params[idx], params[idx + 1]
        idx += 2
        z = jnp.maximum(dot(z, w) + b[...], 0.0)

    # ---- decoder: first layer consumes cat([z, a], -1) == z @ Wz + a * wa ----
    for i in range(n_dec):
        wz, wa, b = params[idx], params[idx + 1], params[idx + 2]
        idx += 3
        y = dot(z, wz) + b[...]
        if i == 0:
            y = y + a * wa[...]            # (tb,1)*(1,dim): attribute-column contribution
        # TODO(synk): for len(decode_dims) > 1 the original PyTorch decode() is shape-inconsistent
        # (it only concatenates `a` before the first decoder Linear); we match the n_dec==1 case.
        z = jnp.maximum(y, 0.0)

    # ---- output Linear (no activation); out block's last dim equals the full array dim ----
    wo, bo = params[idx], params[idx + 1]
    o_ref[...] = (dot(z, wo) + bo[...]).astype(o_ref.dtype)


def generator_forward(x, a, params, *, n_enc, n_dec, block_batch=None, use_bf16=True,
                      max_tile=2048):
    B, in_dim = x.shape
    out_dim = params[-1].shape[1]

    if block_batch is None:
        block_batch, grid = _choose_tiling(
            B, max_tile=max_tile, prefer_even_grid=_is_multi_tensorcore())
    else:
        assert block_batch % 8 == 0
        grid = _cdiv(max(B, 1), block_batch)
    B_pad = block_batch * grid

    if B_pad != B:
        pad = B_pad - B
        x = jnp.pad(x, ((0, pad), (0, 0)))
        a = jnp.pad(a, ((0, pad), (0, 0)))

    kparams = _prep_params(params, n_enc, n_dec, use_bf16)

    in_specs = [
        pl.BlockSpec((block_batch, in_dim), lambda i: (i, 0)),
        pl.BlockSpec((block_batch, 1), lambda i: (i, 0)),
    ]
    for p in kparams:
        in_specs.append(pl.BlockSpec(p.shape, lambda i: (0, 0)))
    out_spec = pl.BlockSpec((block_batch, out_dim), lambda i: (i, 0))

    kernel = functools.partial(_generator_kernel, n_enc, n_dec, use_bf16)

    out = pl.pallas_call(
        kernel,
        out_shape=jax.ShapeDtypeStruct((B_pad, out_dim), jnp.float32),
        grid_spec=pltpu.PrefetchScalarGridSpec(
            num_scalar_prefetch=0,
            grid=(grid,),
            in_specs=in_specs,
            out_specs=out_spec,
        ),
        compiler_params=pltpu.CompilerParams(
            dimension_semantics=("parallel",),
            vmem_limit_bytes=32 * 1024 * 1024,
        ),
    )(x, a, *kparams)

    return out[:B] if B_pad != B else out


def init_params(key, in_dim, encode_dims, decode_dims, out_dim):
    """Deterministic synthetic parameters mirroring the PyTorch module's shapes.

    Weights are stored as (in_features, out_features) -- the transpose of PyTorch's layout --
    and biases as (1, out_features).  The first decoder Linear's weight is split into its
    z-rows (Wz) and its attribute row (wa).
    """
    params = []
    d = in_dim
    for dim in encode_dims:
        key, k1, k2 = jax.random.split(key, 3)
        params += [
            0.1 * jax.random.normal(k1, (d, dim), jnp.float32),   # W_enc  (in, out)
            0.1 * jax.random.normal(k2, (1, dim), jnp.float32),   # b_enc
        ]
        d = dim
    for dim in decode_dims:
        key, k1, k2, k3 = jax.random.split(key, 4)
        params += [
            0.1 * jax.random.normal(k1, (d, dim), jnp.float32),   # Wz_dec (prev, out)
            0.1 * jax.random.normal(k2, (1, dim), jnp.float32),   # wa_dec (attribute row)
            0.1 * jax.random.normal(k3, (1, dim), jnp.float32),   # b_dec
        ]
        d = dim
    key, k1, k2 = jax.random.split(key, 3)
    params += [
        0.1 * jax.random.normal(k1, (d, out_dim), jnp.float32),   # W_out
        0.1 * jax.random.normal(k2, (1, out_dim), jnp.float32),   # b_out
    ]
    return params


def reference_forward(x, a, params, *, n_enc, n_dec):
    """Pure-JAX reference replicating PyTorch Generator.forward(x, a, mode='enc-dec')."""
    idx = 0
    z = x
    for _ in range(n_enc):
        w, b = params[idx], params[idx + 1]
        idx += 2
        z = jax.nn.relu(z @ w + b)
    z = jnp.concatenate([z, a], axis=-1)
    for i in range(n_dec):
        wz, wa, b = params[idx], params[idx + 1], params[idx + 2]
        idx += 3
        w_full = jnp.concatenate([wz, wa], axis=0) if i == 0 else wz
        z = jax.nn.relu(z @ w_full + b)
    wo, bo = params[idx], params[idx + 1]
    return z @ wo + bo


if __name__ == "__main__":
    batch = 16
    in_dim = 16
    encode_dims = [32, 24]
    decode_dims = [16]      # single decoder layer (only case where PyTorch decode() is shape-consistent)
    out_dim = 8

    key = jax.random.PRNGKey(0)
    key, kx, ka, kp = jax.random.split(key, 4)
    x = jax.random.normal(kx, (batch, in_dim), jnp.float32)
    a = jax.random.normal(ka, (batch, 1), jnp.float32)       # the attribute `a`
    params = init_params(kp, in_dim, encode_dims, decode_dims, out_dim)

    n_enc, n_dec = len(encode_dims), len(decode_dims)
    ref = reference_forward(x, a, params, n_enc=n_enc, n_dec=n_dec)

    # f32 path: matches the pure-JAX reference closely.
    out_f32 = jax.block_until_ready(
        generator_forward(x, a, params, n_enc=n_enc, n_dec=n_dec, use_bf16=False))
    assert out_f32.shape == (batch, out_dim)
    assert jnp.allclose(out_f32, ref, rtol=1e-5, atol=1e-5), "f32 kernel mismatch vs. reference"

    # default bf16-MXU path: looser tolerance because of bf16 matmul operands.
    out_bf16 = jax.block_until_ready(
        generator_forward(x, a, params, n_enc=n_enc, n_dec=n_dec))
    assert out_bf16.shape == (batch, out_dim)
    assert jnp.allclose(out_bf16, ref, rtol=5e-2, atol=5e-2), "bf16 kernel mismatch vs. reference"

    # multi-tile + batch-padding path (batch not a multiple of the tile): exercises grid > 1.
    key, kx2, ka2 = jax.random.split(key, 3)
    x2 = jax.random.normal(kx2, (100, in_dim), jnp.float32)
    a2 = jax.random.normal(ka2, (100, 1), jnp.float32)
    ref2 = reference_forward(x2, a2, params, n_enc=n_enc, n_dec=n_dec)
    out2 = jax.block_until_ready(
        generator_forward(x2, a2, params, n_enc=n_enc, n_dec=n_dec,
                          block_batch=64, use_bf16=False))
    assert out2.shape == (100, out_dim)
    assert jnp.allclose(out2, ref2, rtol=1e-5, atol=1e-5), "tiled/padded kernel mismatch"

    print("KERNEL_OK")
</pallas_src>

<mosaic_0001>
module attributes {stable_mosaic.version = 11 : i64} {
  func.func @_generator_kernel(%arg0: i32, %arg1: memref<16x16xf32, #tpu.memory_space<vmem>>, %arg2: memref<16x1xf32, #tpu.memory_space<vmem>>, %arg3: memref<16x32xf32, #tpu.memory_space<vmem>>, %arg4: memref<1x32xf32, #tpu.memory_space<vmem>>, %arg5: memref<32x24xf32, #tpu.memory_space<vmem>>, %arg6: memref<1x24xf32, #tpu.memory_space<vmem>>, %arg7: memref<24x16xf32, #tpu.memory_space<vmem>>, %arg8: memref<1x16xf32, #tpu.memory_space<vmem>>, %arg9: memref<1x16xf32, #tpu.memory_space<vmem>>, %arg10: memref<16x8xf32, #tpu.memory_space<vmem>>, %arg11: memref<1x8xf32, #tpu.memory_space<vmem>>, %arg12: memref<16x8xf32, #tpu.memory_space<vmem>>) attributes {dimension_semantics = [#tpu.dimension_semantics<parallel>], iteration_bounds = array<i64: 1>, scalar_prefetch = 0 : i64, scratch_operands = 0 : i64, tpu.core_type = #tpu.core_type<tc>, window_params = [{transform_indices = @transform_0, window_bounds = array<i64: 16, 16>}, {transform_indices = @transform_1, window_bounds = array<i64: 16, 1>}, {pipeline_mode = #tpu.pipeline_mode<synchronous>, transform_indices = @transform_2, window_bounds = array<i64: 16, 32>}, {pipeline_mode = #tpu.pipeline_mode<synchronous>, transform_indices = @transform_3, window_bounds = array<i64: 1, 32>}, {pipeline_mode = #tpu.pipeline_mode<synchronous>, transform_indices = @transform_4, window_bounds = array<i64: 32, 24>}, {pipeline_mode = #tpu.pipeline_mode<synchronous>, transform_indices = @transform_5, window_bounds = array<i64: 1, 24>}, {pipeline_mode = #tpu.pipeline_mode<synchronous>, transform_indices = @transform_6, window_bounds = array<i64: 24, 16>}, {pipeline_mode = #tpu.pipeline_mode<synchronous>, transform_indices = @transform_7, window_bounds = array<i64: 1, 16>}, {pipeline_mode = #tpu.pipeline_mode<synchronous>, transform_indices = @transform_8, window_bounds = array<i64: 1, 16>}, {pipeline_mode = #tpu.pipeline_mode<synchronous>, transform_indices = @transform_9, window_bounds = array<i64: 16, 8>}, {pipeline_mode = #tpu.pipeline_mode<synchronous>, transform_indices = @transform_10, window_bounds = array<i64: 1, 8>}, {transform_indices = @transform_11, window_bounds = array<i64: 16, 8>}]} {
    %c0 = arith.constant 0 : index
    %c0_0 = arith.constant 0 : index
    %0 = vector.load %arg2[%c0, %c0_0] : memref<16x1xf32, #tpu.memory_space<vmem>>, vector<16x1xf32>
    %c0_1 = arith.constant 0 : index
    %c0_2 = arith.constant 0 : index
    %1 = vector.load %arg1[%c0_1, %c0_2] : memref<16x16xf32, #tpu.memory_space<vmem>>, vector<16x16xf32>
    %c0_3 = arith.constant 0 : index
    %c0_4 = arith.constant 0 : index
    %2 = vector.load %arg3[%c0_3, %c0_4] : memref<16x32xf32, #tpu.memory_space<vmem>>, vector<16x32xf32>
    %cst = arith.constant dense<0.000000e+00> : vector<16x32xf32>
    %3 = tpu.matmul %1, %2, %cst {dimension_numbers = #tpu.dot_dimension_numbers<[1], [0], [0], [1], [0, 0, 1, 1], [], []>} : vector<16x16xf32>, vector<16x32xf32>, vector<16x32xf32> -> vector<16x32xf32>
    %c0_5 = arith.constant 0 : index
    %c0_6 = arith.constant 0 : index
    %4 = vector.load %arg4[%c0_5, %c0_6] : memref<1x32xf32, #tpu.memory_space<vmem>>, vector<1x32xf32>
    %5 = vector.broadcast %4 : vector<1x32xf32> to vector<16x32xf32>
    %6 = arith.addf %3, %5 : vector<16x32xf32>
    %cst_7 = arith.constant 0.000000e+00 : f32
    %7 = vector.broadcast %cst_7 : f32 to vector<16x32xf32>
    %8 = arith.maximumf %6, %7 : vector<16x32xf32>
    %c0_8 = arith.constant 0 : index
    %c0_9 = arith.constant 0 : index
    %9 = vector.load %arg5[%c0_8, %c0_9] : memref<32x24xf32, #tpu.memory_space<vmem>>, vector<32x24xf32>
    %cst_10 = arith.constant dense<0.000000e+00> : vector<16x24xf32>
    %10 = tpu.matmul %8, %9, %cst_10 {dimension_numbers = #tpu.dot_dimension_numbers<[1], [0], [0], [1], [0, 0, 1, 1], [], []>} : vector<16x32xf32>, vector<32x24xf32>, vector<16x24xf32> -> vector<16x24xf32>
    %c0_11 = arith.constant 0 : index
    %c0_12 = arith.constant 0 : index
    %11 = vector.load %arg6[%c0_11, %c0_12] : memref<1x24xf32, #tpu.memory_space<vmem>>, vector<1x24xf32>
    %12 = vector.broadcast %11 : vector<1x24xf32> to vector<16x24xf32>
    %13 = arith.addf %10, %12 : vector<16x24xf32>
    %cst_13 = arith.constant 0.000000e+00 : f32
    %14 = vector.broadcast %cst_13 : f32 to vector<16x24xf32>
    %15 = arith.maximumf %13, %14 : vector<16x24xf32>
    %c0_14 = arith.constant 0 : index
    %c0_15 = arith.constant 0 : index
    %16 = vector.load %arg7[%c0_14, %c0_15] : memref<24x16xf32, #tpu.memory_space<vmem>>, vector<24x16xf32>
    %cst_16 = arith.constant dense<0.000000e+00> : vector<16x16xf32>
    %17 = tpu.matmul %15, %16, %cst_16 {dimension_numbers = #tpu.dot_dimension_numbers<[1], [0], [0], [1], [0, 0, 1, 1], [], []>} : vector<16x24xf32>, vector<24x16xf32>, vector<16x16xf32> -> vector<16x16xf32>
    %c0_17 = arith.constant 0 : index
    %c0_18 = arith.constant 0 : index
    %18 = vector.load %arg9[%c0_17, %c0_18] : memref<1x16xf32, #tpu.memory_space<vmem>>, vector<1x16xf32>
    %19 = vector.broadcast %18 : vector<1x16xf32> to vector<16x16xf32>
    %20 = arith.addf %17, %19 : vector<16x16xf32>
    %c0_19 = arith.constant 0 : index
    %c0_20 = arith.constant 0 : index
    %21 = vector.load %arg8[%c0_19, %c0_20] : memref<1x16xf32, #tpu.memory_space<vmem>>, vector<1x16xf32>
    %22 = vector.broadcast %0 : vector<16x1xf32> to vector<16x16xf32>
    %23 = vector.broadcast %21 : vector<1x16xf32> to vector<16x16xf32>
    %24 = arith.mulf %22, %23 : vector<16x16xf32>
    %25 = arith.addf %20, %24 : vector<16x16xf32>
    %cst_21 = arith.constant 0.000000e+00 : f32
    %26 = vector.broadcast %cst_21 : f32 to vector<16x16xf32>
    %27 = arith.maximumf %25, %26 : vector<16x16xf32>
    %c0_22 = arith.constant 0 : index
    %c0_23 = arith.constant 0 : index
    %28 = vector.load %arg10[%c0_22, %c0_23] : memref<16x8xf32, #tpu.memory_space<vmem>>, vector<16x8xf32>
    %cst_24 = arith.constant dense<0.000000e+00> : vector<16x8xf32>
    %29 = tpu.matmul %27, %28, %cst_24 {dimension_numbers = #tpu.dot_dimension_numbers<[1], [0], [0], [1], [0, 0, 1, 1], [], []>} : vector<16x16xf32>, vector<16x8xf32>, vector<16x8xf32> -> vector<16x8xf32>
    %c0_25 = arith.constant 0 : index
    %c0_26 = arith.constant 0 : index
    %30 = vector.load %arg11[%c0_25, %c0_26] : memref<1x8xf32, #tpu.memory_space<vmem>>, vector<1x8xf32>
    %31 = vector.broadcast %30 : vector<1x8xf32> to vector<16x8xf32>
    %32 = arith.addf %29, %31 : vector<16x8xf32>
    %c0_27 = arith.constant 0 : index
    %c0_28 = arith.constant 0 : index
    %33 = vector.load %arg12[%c0_27, %c0_28] : memref<16x8xf32, #tpu.memory_space<vmem>>, vector<16x8xf32>
    tpu.vector_store %arg12[%c0_27, %c0_28], %32 {strides = array<i32>} : memref<16x8xf32, #tpu.memory_space<vmem>>, vector<16x8xf32>,
    return
  }
  func.func @transform_0(%arg0: i32) -> (i32, i32) {
    %c0_i32 = arith.constant 0 : i32
    %c0_i32_0 = arith.constant 0 : i32
    return %arg0, %c0_i32 : i32, i32
  }
  func.func @transform_1(%arg0: i32) -> (i32, i32) {
    %c0_i32 = arith.constant 0 : i32
    %c0_i32_0 = arith.constant 0 : i32
    return %arg0, %c0_i32 : i32, i32
  }
  func.func @transform_2(%arg0: i32) -> (i32, i32) {
    %c0_i32 = arith.constant 0 : i32
    %c0_i32_0 = arith.constant 0 : i32
    %c0_i32_1 = arith.constant 0 : i32
    return %c0_i32, %c0_i32_0 : i32, i32
  }
  func.func @transform_3(%arg0: i32) -> (i32, i32) {
    %c0_i32 = arith.constant 0 : i32
    %c0_i32_0 = arith.constant 0 : i32
    %c0_i32_1 = arith.constant 0 : i32
    return %c0_i32, %c0_i32_0 : i32, i32
  }
  func.func @transform_4(%arg0: i32) -> (i32, i32) {
    %c0_i32 = arith.constant 0 : i32
    %c0_i32_0 = arith.constant 0 : i32
    %c0_i32_1 = arith.constant 0 : i32
    return %c0_i32, %c0_i32_0 : i32, i32
  }
  func.func @transform_5(%arg0: i32) -> (i32, i32) {
    %c0_i32 = arith.constant 0 : i32
    %c0_i32_0 = arith.constant 0 : i32
    %c0_i32_1 = arith.constant 0 : i32
    return %c0_i32, %c0_i32_0 : i32, i32
  }
  func.func @transform_6(%arg0: i32) -> (i32, i32) {
    %c0_i32 = arith.constant 0 : i32
    %c0_i32_0 = arith.constant 0 : i32
    %c0_i32_1 = arith.constant 0 : i32
    return %c0_i32, %c0_i32_0 : i32, i32
  }
  func.func @transform_7(%arg0: i32) -> (i32, i32) {
    %c0_i32 = arith.constant 0 : i32
    %c0_i32_0 = arith.constant 0 : i32
    %c0_i32_1 = arith.constant 0 : i32
    return %c0_i32, %c0_i32_0 : i32, i32
  }
  func.func @transform_8(%arg0: i32) -> (i32, i32) {
    %c0_i32 = arith.constant 0 : i32
    %c0_i32_0 = arith.constant 0 : i32
    %c0_i32_1 = arith.constant 0 : i32
    return %c0_i32, %c0_i32_0 : i32, i32
  }
  func.func @transform_9(%arg0: i32) -> (i32, i32) {
    %c0_i32 = arith.constant 0 : i32
    %c0_i32_0 = arith.constant 0 : i32
    %c0_i32_1 = arith.constant 0 : i32
    return %c0_i32, %c0_i32_0 : i32, i32
  }
  func.func @transform_10(%arg0: i32) -> (i32, i32) {
    %c0_i32 = arith.constant 0 : i32
    %c0_i32_0 = arith.constant 0 : i32
    %c0_i32_1 = arith.constant 0 : i32
    return %c0_i32, %c0_i32_0 : i32, i32
  }
  func.func @transform_11(%arg0: i32) -> (i32, i32) {
    %c0_i32 = arith.constant 0 : i32
    %c0_i32_0 = arith.constant 0 : i32
    return %arg0, %c0_i32 : i32, i32
  }
}

</mosaic_0001>

<llo_original>
// kernel: tpu_custom_call.1
$region0: #{tpu_custom_call.1}
  #allocation0 [shape = 'u32[]', space=smem, size = 0x4, offset = 0x4, fixed_abs, tag = 'smem constant byte address 0x4 - core index']
  #allocation1 [shape = 'u32[72,128]{1,0:T(1,128)}', space=vmem, size = 0x9000, scoped, tag = 'internal scratch']
  %s0 = inlined_call_operand.vmem [shape: f32[16,16], index: 0, kind: input, shape index: {}]
  %s1 = inlined_call_operand.vmem [shape: f32[16,1], index: 1, kind: input, shape index: {}]
  %s2 = inlined_call_operand.vmem [shape: f32[16,32], index: 2, kind: input, shape index: {}]
  %s3 = inlined_call_operand.vmem [shape: f32[1,32], index: 3, kind: input, shape index: {}]
  %s4 = inlined_call_operand.vmem [shape: f32[32,24], index: 4, kind: input, shape index: {}]
  %s5 = inlined_call_operand.vmem [shape: f32[1,24], index: 5, kind: input, shape index: {}]
  %s6 = inlined_call_operand.vmem [shape: f32[24,16], index: 6, kind: input, shape index: {}]
  %s7 = inlined_call_operand.vmem [shape: f32[1,16], index: 7, kind: input, shape index: {}]
  %s8 = inlined_call_operand.vmem [shape: f32[1,16], index: 8, kind: input, shape index: {}]
  %s9 = inlined_call_operand.vmem [shape: f32[16,8], index: 9, kind: input, shape index: {}]
  %s10 = inlined_call_operand.vmem [shape: f32[1,8], index: 10, kind: input, shape index: {}]
  %s11 = inlined_call_operand.vmem [shape: f32[16,8], index: 11, kind: output, shape index: {}]
  %s12 = sld [smem:[#allocation0]]
  $region54: #{tpu_custom_call.1} parent=0
    _
  %s14 = ssub.s32 1, %s12
  %s15 = scalar_select 0, %s14, %s12
  // Predicated region
  $region2: #{tpu_custom_call.1} parent=0 // pred_check
    _
  $region3: #{tpu_custom_call.1} parent=0 // pred_check_branch
    %17 = sbr.rel (0) target = $region5
  $region4: #{tpu_custom_call.1} parent=0 // pred_region
    _
  $region5: #{tpu_custom_call.1} parent=0 // pred_fallthru
    _
  // Predicated region
  $region6: #{tpu_custom_call.1} parent=0 // pred_check
    _
  $region7: #{tpu_custom_call.1} parent=0 // pred_check_branch
    %19 = sbr.rel (0) target = $region9
  $region8: #{tpu_custom_call.1} parent=0 // pred_region
    _
  $region9: #{tpu_custom_call.1} parent=0 // pred_fallthru
    _
  // Predicated region
  $region10: #{tpu_custom_call.1} parent=0 // pred_check
    _
  $region11: #{tpu_custom_call.1} parent=0 // pred_check_branch
    %21 = sbr.rel (0) target = $region13
  $region12: #{tpu_custom_call.1} parent=0 // pred_region
    _
  $region13: #{tpu_custom_call.1} parent=0 // pred_fallthru
    _
  // Predicated region
  $region14: #{tpu_custom_call.1} parent=0 // pred_check
    _
  $region15: #{tpu_custom_call.1} parent=0 // pred_check_branch
    %23 = sbr.rel (0) target = $region17
  $region16: #{tpu_custom_call.1} parent=0 // pred_region
    _
  $region17: #{tpu_custom_call.1} parent=0 // pred_fallthru
    _
  // Predicated region
  $region18: #{tpu_custom_call.1} parent=0 // pred_check
    _
  $region19: #{tpu_custom_call.1} parent=0 // pred_check_branch
    %25 = sbr.rel (0) target = $region21
  $region20: #{tpu_custom_call.1} parent=0 // pred_region
    _
  $region21: #{tpu_custom_call.1} parent=0 // pred_fallthru
    _
  // Predicated region
  $region22: #{tpu_custom_call.1} parent=0 // pred_check
    _
  $region23: #{tpu_custom_call.1} parent=0 // pred_check_branch
    %27 = sbr.rel (0) target = $region25
  $region24: #{tpu_custom_call.1} parent=0 // pred_region
    _
  $region25: #{tpu_custom_call.1} parent=0 // pred_fallthru
    _
  // Predicated region
  $region26: #{tpu_custom_call.1} parent=0 // pred_check
    _
  $region27: #{tpu_custom_call.1} parent=0 // pred_check_branch
    %29 = sbr.rel (0) target = $region29
  $region28: #{tpu_custom_call.1} parent=0 // pred_region
    _
  $region29: #{tpu_custom_call.1} parent=0 // pred_fallthru
    _
  // Predicated region
  $region30: #{tpu_custom_call.1} parent=0 // pred_check
    _
  $region31: #{tpu_custom_call.1} parent=0 // pred_check_branch
    %31 = sbr.rel (0) target = $region33
  $region32: #{tpu_custom_call.1} parent=0 // pred_region
    _
  $region33: #{tpu_custom_call.1} parent=0 // pred_fallthru
    _
  // Predicated region
  $region34: #{tpu_custom_call.1} parent=0 // pred_check
    _
  $region35: #{tpu_custom_call.1} parent=0 // pred_check_branch
    %33 = sbr.rel (0) target = $region37
  $region36: #{tpu_custom_call.1} parent=0 // pred_region
    _
  $region37: #{tpu_custom_call.1} parent=0 // pred_fallthru
    _
  // Predicated region
  $region38: #{tpu_custom_call.1} parent=0 // pred_check
    _
  $region39: #{tpu_custom_call.1} parent=0 // pred_check_branch
    %35 = sbr.rel (0) target = $region41
  $region40: #{tpu_custom_call.1} parent=0 // pred_region
    _
  $region41: #{tpu_custom_call.1} parent=0 // pred_fallthru
    _
  // Predicated region
  $region42: #{tpu_custom_call.1} parent=0 // pred_check
    _
  $region43: #{tpu_custom_call.1} parent=0 // pred_check_branch
    %37 = sbr.rel (0) target = $region45
  $region44: #{tpu_custom_call.1} parent=0 // pred_region
    _
  $region45: #{tpu_custom_call.1} parent=0 // pred_fallthru
    _
  %v38 = vld [vmem:[%s1] sm:$0xff]
  %v39 = vld [vmem:[%s1 + $0x8] sm:$0xff]
  %v40 = vld [vmem:[%s0] sm:$0xff]
  %v41 = vld [vmem:[%s0 + $0x8] sm:$0xff]
  %v42 = vld [vmem:[%s2] sm:$0xff]
  %v43 = vld [vmem:[%s2 + $0x8] sm:$0xff]
  %v44 = vld [vmem:[%s3] sm:$0x1]
  %v46 = vperm.slane %v44, 0
  %vm48 = vcmask 130048
  %v50 = vsel %vm48, %v40, 0
  %v53 = vsel %vm48, %v41, 0
  %55 = vmatpush.msra.mxu0 0.0
  %56 = vmatpush.msra.mxu0 0.0
  %57 = vmatpush.msra.mxu0 0.0
  %58 = vmatpush.msra.mxu0 0.0
  %59 = vmatpush.msra.mxu0 0.0
  %60 = vmatpush.msra.mxu0 0.0
  %61 = vmatpush.msra.mxu0 0.0
  %62 = vmatpush.msra.mxu0 0.0
  %63 = vmatpush.msra.mxu0 0.0
  %64 = vmatpush.msra.mxu0 0.0
  %65 = vmatpush.msra.mxu0 0.0
  %66 = vmatpush.msra.mxu0 0.0
  %67 = vmatpush.msra.mxu0 0.0
  %68 = vmatpush.msra.mxu0 0.0
  %69 = vmatpush.msra.mxu0 %v43
  %70 = vmatpush.msra.mxu0 %v42
  %71 = vmatmul.f32.gmra.mxu0 %v50
  %v72 = vpop.f32.mrf.mxu0
  %v73 = vadd.f32 %v46, %v72
  %74 = vmatmul.f32.gmra.mxu0 %v53
  %v75 = vpop.f32.mrf.mxu0
  %v76 = vadd.f32 %v46, %v75
  %77 = vdwg.mxu0
  %v78 = vmax.f32 %v73, 0.0
  %v79 = vmax.f32 %v76, 0.0
  %v80 = vld [vmem:[%s4] sm:$0xff]
  %v81 = vld [vmem:[%s4 + $0x8] sm:$0xff]
  %v82 = vld [vmem:[%s4 + $0x10] sm:$0xff]
  %v83 = vld [vmem:[%s4 + $0x18] sm:$0xff]
  %v84 = vld [vmem:[%s5] sm:$0x1]
  %v86 = vperm.slane %v84, 0
  %vm88 = vcmask 261120
  %v90 = vsel %vm88, %v78, 0
  %v93 = vsel %vm88, %v79, 0
  %95 = vmatpush.msra.mxu0 0.0
  %96 = vmatpush.msra.mxu0 0.0
  %97 = vmatpush.msra.mxu0 0.0
  %98 = vmatpush.msra.mxu0 0.0
  %99 = vmatpush.msra.mxu0 0.0
  %100 = vmatpush.msra.mxu0 0.0
  %101 = vmatpush.msra.mxu0 0.0
  %102 = vmatpush.msra.mxu0 0.0
  %103 = vmatpush.msra.mxu0 0.0
  %104 = vmatpush.msra.mxu0 0.0
  %105 = vmatpush.msra.mxu0 0.0
  %106 = vmatpush.msra.mxu0 0.0
  %107 = vmatpush.msra.mxu0 %v83
  %108 = vmatpush.msra.mxu0 %v82
  %109 = vmatpush.msra.mxu0 %v81
  %110 = vmatpush.msra.mxu0 %v80
  %111 = vmatmul.f32.gmra.mxu0 %v90
  %v112 = vpop.f32.mrf.mxu0
  %v113 = vadd.f32 %v86, %v112
  %114 = vmatmul.f32.gmra.mxu0 %v93
  %v115 = vpop.f32.mrf.mxu0
  %v116 = vadd.f32 %v86, %v115
  %117 = vdwg.mxu0
  %v118 = vmax.f32 %v113, 0.0
  %v119 = vmax.f32 %v116, 0.0
  %v120 = vld [vmem:[%s6] sm:$0xff]
  %v121 = vld [vmem:[%s6 + $0x8] sm:$0xff]
  %v122 = vld [vmem:[%s6 + $0x10] sm:$0xff]
  %v123 = vld [vmem:[%s8] sm:$0x1]
  %v125 = vperm.slane %v123, 0
  %vm127 = vcmask 195584
  %v129 = vsel %vm127, %v118, 0
  %v132 = vsel %vm127, %v119, 0
  %134 = vmatpush.msra.mxu0 0.0
  %135 = vmatpush.msra.mxu0 0.0
  %136 = vmatpush.msra.mxu0 0.0
  %137 = vmatpush.msra.mxu0 0.0
  %138 = vmatpush.msra.mxu0 0.0
  %139 = vmatpush.msra.mxu0 0.0
  %140 = vmatpush.msra.mxu0 0.0
  %141 = vmatpush.msra.mxu0 0.0
  %142 = vmatpush.msra.mxu0 0.0
  %143 = vmatpush.msra.mxu0 0.0
  %144 = vmatpush.msra.mxu0 0.0
  %145 = vmatpush.msra.mxu0 0.0
  %146 = vmatpush.msra.mxu0 0.0
  %147 = vmatpush.msra.mxu0 %v122
  %148 = vmatpush.msra.mxu0 %v121
  %149 = vmatpush.msra.mxu0 %v120
  %150 = vmatmul.f32.gmra.mxu0 %v129
  %v151 = vpop.f32.mrf.mxu0
  %v152 = vadd.f32 %v125, %v151
  %153 = vmatmul.f32.gmra.mxu0 %v132
  %v154 = vpop.f32.mrf.mxu0
  %v155 = vadd.f32 %v125, %v154
  %156 = vdwg.mxu0
  %v157 = vld [vmem:[%s7] sm:$0x1]
  %159 = vset.pattern.permute.xlu0 0
  %160 = vperm.xlu0 %159, %v38
  %v161 = vpop.permute.xlu0 %160
  %164 = vset.pattern.permute.xlu0 0
  %165 = vperm.xlu0 %164, %v39
  %v166 = vpop.permute.xlu0 %165
  %v169 = vperm.slane %v157, 0
  %v171 = vmul.f32 %v161, %v169
  %v172 = vmul.f32 %v166, %v169
  %v173 = vadd.f32 %v152, %v171
  %v174 = vadd.f32 %v155, %v172
  %v175 = vmax.f32 %v173, 0.0
  %v176 = vmax.f32 %v174, 0.0
  %v177 = vld [vmem:[%s9] sm:$0xff]
  %v178 = vld [vmem:[%s9 + $0x8] sm:$0xff]
  %v179 = vld [vmem:[%s10] sm:$0x1]
  %v181 = vperm.slane %v179, 0
  %v184 = vsel %vm48, %v175, 0
  %v187 = vsel %vm48, %v176, 0
  %189 = vmatpush.msra.mxu0 0.0
  %190 = vmatpush.msra.mxu0 0.0
  %191 = vmatpush.msra.mxu0 0.0
  %192 = vmatpush.msra.mxu0 0.0
  %193 = vmatpush.msra.mxu0 0.0
  %194 = vmatpush.msra.mxu0 0.0
  %195 = vmatpush.msra.mxu0 0.0
  %196 = vmatpush.msra.mxu0 0.0
  %197 = vmatpush.msra.mxu0 0.0
  %198 = vmatpush.msra.mxu0 0.0
  %199 = vmatpush.msra.mxu0 0.0
  %200 = vmatpush.msra.mxu0 0.0
  %201 = vmatpush.msra.mxu0 0.0
  %202 = vmatpush.msra.mxu0 0.0
  %203 = vmatpush.msra.mxu0 %v178
  %204 = vmatpush.msra.mxu0 %v177
  %205 = vmatmul.f32.gmra.mxu0 %v184
  %v206 = vpop.f32.mrf.mxu0
  %v207 = vadd.f32 %v181, %v206
  %208 = vmatmul.f32.gmra.mxu0 %v187
  %v209 = vpop.f32.mrf.mxu0
  %v210 = vadd.f32 %v181, %v209
  %211 = vdwg.mxu0
  %vm212 = vcmask 64512
  %213 = vst.msk [vmem:[%s11] sm:$0xff] %vm212, %v207
  %214 = vst.msk [vmem:[%s11 + $0x8] sm:$0xff] %vm212, %v210
  // Predicated region
  $region46: #{tpu_custom_call.1} parent=0 // pred_check
    _
  $region47: #{tpu_custom_call.1} parent=0 // pred_check_branch
    %216 = sbr.rel (0) target = $region49
  $region48: #{tpu_custom_call.1} parent=0 // pred_region
    _
  $region49: #{tpu_custom_call.1} parent=0 // pred_fallthru
    _
  // Predicated region
  $region50: #{tpu_custom_call.1} parent=0 // pred_check
    _
  $region51: #{tpu_custom_call.1} parent=0 // pred_check_branch
    %218 = sbr.rel (0) target = $region53
  $region52: #{tpu_custom_call.1} parent=0 // pred_region
    _
  $region53: #{tpu_custom_call.1} parent=0 // pred_fallthru
    _

</llo_original>
